<compile_context>
chip_gen: v7x
topology: tpu7x:2x2x1
jax: 0.10.0
libtpu: 0.0.40
codegen_flags: <defaults>
</compile_context>

<pallas_src>
import jax
import jax.numpy as jnp
from jax.experimental import pallas as pl
from jax.experimental.pallas import tpu as pltpu


def _cheb_matmul_relu_kernel(x_ref, w_ref, o_ref):
    # x_ref: (tm, V*F), w_ref: (V*F, V*O), o_ref: (tm, V*O)
    acc = jnp.dot(x_ref[...], w_ref[...], preferred_element_type=jnp.float32)
    o_ref[...] = jnp.maximum(acc, 0.0).astype(o_ref.dtype)


def cheb_conv_with_att_static(x, att, cheb, thetas, *, block_rows=256):
    """Forward pass of ChebConvWithAttStatic (eval mode).

    Args:
      x:      (B, T, V, F) float32 input signal.
      att:    (V, V) static spatial attention (multiplied into every T_k).
      cheb:   (K, V, V) stacked Chebyshev polynomials T_k.
      thetas: (K, F, O) stacked Theta_k filter weights.

    Returns:
      (B, T, V, O) float32, relu-activated.
    """
    B, T, V, F = x.shape
    K, _, O = thetas.shape

    # --- host/XLA-side precompute (batch independent) ------------------------
    A = cheb * att[None, :, :]                                  # (K, V, V)
    # W[w*F+f, v*O+o] = sum_k A[k, v, w] * thetas[k, f, o]
    W = jnp.einsum('kvw,kfo->wfvo', A, thetas).reshape(V * F, V * O)
    W = W.astype(jnp.float32)

    M = B * T
    x2d = x.reshape(M, V * F).astype(jnp.float32)

    # Row tile: as many (b, t) rows per grid step as possible (cap block_rows).
    tm = min(block_rows, M)
    Mp = pl.cdiv(M, tm) * tm
    if Mp != M:
        x2d = jnp.pad(x2d, ((0, Mp - M), (0, 0)))

    out2d = pl.pallas_call(
        _cheb_matmul_relu_kernel,
        out_shape=jax.ShapeDtypeStruct((Mp, V * O), jnp.float32),
        grid_spec=pltpu.PrefetchScalarGridSpec(
            num_scalar_prefetch=0,
            grid=(Mp // tm,),
            in_specs=[
                pl.BlockSpec((tm, V * F), lambda i: (i, 0)),     # x2d row tile
                pl.BlockSpec((V * F, V * O), lambda i: (0, 0)),  # folded weight
            ],
            out_specs=pl.BlockSpec((tm, V * O), lambda i: (i, 0)),
        ),
        compiler_params=pltpu.CompilerParams(
            dimension_semantics=("parallel",)),
    )(x2d, W)

    return out2d[:M].reshape(B, T, V, O)


def cheb_conv_with_att_static_ref(x, att, cheb, thetas):
    """Pure-JAX transliteration of the PyTorch forward (eval mode, no dropout)."""
    B, T, V, F = x.shape
    K, _, O = thetas.shape
    outs = []
    for t in range(T):
        graph_signal = x[:, t, :, :]                            # (B, V, F)
        out = jnp.zeros((B, V, O), dtype=jnp.float32)
        for k in range(K):
            t_k_with_at = cheb[k] * att                         # (V, V)
            rhs = jnp.einsum('vw,bwf->bvf', t_k_with_at, graph_signal)
            out = out + jnp.einsum('bvf,fo->bvo', rhs, thetas[k])
        outs.append(out[..., None])
    outputs = jnp.concatenate(outs, axis=-1)                    # (B, V, O, T)
    outputs = jnp.transpose(outputs, (0, 3, 1, 2))              # (B, T, V, O)
    return jax.nn.relu(outputs)


if __name__ == "__main__":
    # batch=2, timesteps=8, vertices=16, in_features=4, cheb order K=3, filters=16
    B, T, V, Fin, K, O = 2, 8, 16, 4, 3, 16

    key = jax.random.PRNGKey(0)
    keys = jax.random.split(key, 3 + K)
    kx, ka, kadj, kth = keys[0], keys[1], keys[2], keys[3:]

    x = jax.random.normal(kx, (B, T, V, Fin), dtype=jnp.float32)
    att = jax.random.uniform(ka, (V, V), dtype=jnp.float32)

    # Deterministic Chebyshev polynomials of a scaled normalized Laplacian.
    adj = jax.random.uniform(kadj, (V, V), dtype=jnp.float32)
    adj = 0.5 * (adj + adj.T)
    d_inv_sqrt = 1.0 / jnp.sqrt(jnp.sum(adj, axis=1))
    lap = jnp.eye(V, dtype=jnp.float32) - d_inv_sqrt[:, None] * adj * d_inv_sqrt[None, :]
    l_tilde = lap - jnp.eye(V, dtype=jnp.float32)               # 2/lambda_max * L - I, lambda_max=2
    cheb_list = [jnp.eye(V, dtype=jnp.float32), l_tilde]
    for _ in range(2, K):
        cheb_list.append(2.0 * l_tilde @ cheb_list[-1] - cheb_list[-2])
    cheb = jnp.stack(cheb_list[:K], axis=0)                     # (K, V, V)

    thetas = jnp.stack(
        [jax.random.normal(k_, (Fin, O), dtype=jnp.float32) for k_ in kth],
        axis=0)                                                 # (K, F, O)

    out = cheb_conv_with_att_static(x, att, cheb, thetas)
    out = jax.block_until_ready(out)

    ref = cheb_conv_with_att_static_ref(x, att, cheb, thetas)
    assert out.shape == (B, T, V, O)
    assert jnp.allclose(out, ref, atol=1e-4, rtol=1e-4), "mismatch vs reference"

    print("KERNEL_OK")
</pallas_src>

<mosaic_0001>
module attributes {stable_mosaic.version = 11 : i64} {
  func.func @_cheb_matmul_relu_kernel(%arg0: i32, %arg1: memref<16x64xf32, #tpu.memory_space<vmem>>, %arg2: memref<64x256xf32, #tpu.memory_space<vmem>>, %arg3: memref<16x256xf32, #tpu.memory_space<vmem>>) attributes {dimension_semantics = [#tpu.dimension_semantics<parallel>], iteration_bounds = array<i64: 1>, scalar_prefetch = 0 : i64, scratch_operands = 0 : i64, tpu.core_type = #tpu.core_type<tc>, window_params = [{transform_indices = @transform_0, window_bounds = array<i64: 16, 64>}, {pipeline_mode = #tpu.pipeline_mode<synchronous>, transform_indices = @transform_1, window_bounds = array<i64: 64, 256>}, {transform_indices = @transform_2, window_bounds = array<i64: 16, 256>}]} {
    %c0 = arith.constant 0 : index
    %c0_0 = arith.constant 0 : index
    %0 = vector.load %arg1[%c0, %c0_0] : memref<16x64xf32, #tpu.memory_space<vmem>>, vector<16x64xf32>
    %c0_1 = arith.constant 0 : index
    %c0_2 = arith.constant 0 : index
    %1 = vector.load %arg2[%c0_1, %c0_2] : memref<64x256xf32, #tpu.memory_space<vmem>>, vector<64x256xf32>
    %cst = arith.constant dense<0.000000e+00> : vector<16x256xf32>
    %2 = tpu.matmul %0, %1, %cst {dimension_numbers = #tpu.dot_dimension_numbers<[1], [0], [0], [1], [0, 0, 1, 1], [], []>} : vector<16x64xf32>, vector<64x256xf32>, vector<16x256xf32> -> vector<16x256xf32>
    %cst_3 = arith.constant 0.000000e+00 : f32
    %3 = vector.broadcast %cst_3 : f32 to vector<16x256xf32>
    %4 = arith.maximumf %2, %3 : vector<16x256xf32>
    %c0_4 = arith.constant 0 : index
    %c0_5 = arith.constant 0 : index
    %5 = vector.load %arg3[%c0_4, %c0_5] : memref<16x256xf32, #tpu.memory_space<vmem>>, vector<16x256xf32>
    tpu.vector_store %arg3[%c0_4, %c0_5], %4 {strides = array<i32>} : memref<16x256xf32, #tpu.memory_space<vmem>>, vector<16x256xf32>,
    return
  }
  func.func @transform_0(%arg0: i32) -> (i32, i32) {
    %c0_i32 = arith.constant 0 : i32
    %c0_i32_0 = arith.constant 0 : i32
    return %arg0, %c0_i32 : i32, i32
  }
  func.func @transform_1(%arg0: i32) -> (i32, i32) {
    %c0_i32 = arith.constant 0 : i32
    %c0_i32_0 = arith.constant 0 : i32
    %c0_i32_1 = arith.constant 0 : i32
    return %c0_i32, %c0_i32_0 : i32, i32
  }
  func.func @transform_2(%arg0: i32) -> (i32, i32) {
    %c0_i32 = arith.constant 0 : i32
    %c0_i32_0 = arith.constant 0 : i32
    return %arg0, %c0_i32 : i32, i32
  }
}

</mosaic_0001>

<llo_original>
// kernel: tpu_custom_call.1
$region0: #{tpu_custom_call.1}
  #allocation0 [shape = 'u32[]', space=smem, size = 0x4, offset = 0x4, fixed_abs, tag = 'smem constant byte address 0x4 - core index']
  #allocation1 [shape = 'u32[144,128]{1,0:T(1,128)}', space=vmem, size = 0x12000, scoped, tag = 'internal scratch']
  %s0 = inlined_call_operand.hbm [shape: f32[16,64], index: 0, kind: input, shape index: {}]
  %s1 = inlined_call_operand.hbm [shape: f32[64,256], index: 1, kind: input, shape index: {}]
  %s2 = inlined_call_operand.hbm [shape: f32[16,256], index: 2, kind: output, shape index: {}]
  %s3 = sld [smem:[#allocation0]]
  $region26: #{tpu_custom_call.1} parent=0
    _
  %s5 = ssub.s32 1, %s3
  %s6 = scalar_select 0, %s5, %s3
  $region1: #{tpu_custom_call.1} parent=0
    #allocation2 [shape = 'u8[8192]{0}', space=vmem, size = 0x2000, scoped, tag = 'input window, operand 0, single buffered']
    #allocation3 [shape = 's32[1]{0}', space=sflag, size = 0x4, scoped, tag = 'scoped memory for tpu_custom_call.1']
    #allocation4 [shape = 's32[1]{0}', space=sflag, size = 0x4, scoped, tag = 'scoped memory for tpu_custom_call.1']
    #allocation5 [shape = 'u8[65536]{0}', space=vmem, size = 0x10000, scoped, tag = 'input window, operand 1, single buffered']
    #allocation6 [shape = 's32[1]{0}', space=sflag, size = 0x4, scoped, tag = 'scoped memory for tpu_custom_call.1']
    #allocation7 [shape = 'u8[16384]{0}', space=vmem, size = 0x4000, scoped, tag = 'output window, operand 0, single buffered']
    %7 = vsyncpa [#allocation3], 0
    %8 = vsyncpa [#allocation6], 0
    %9 = vsyncpa [#allocation4], 0
    // Predicated region
    $region2: #{tpu_custom_call.1} parent=1 // pred_check
      _
    $region3: #{tpu_custom_call.1} parent=1 // pred_check_branch
      %11 = sbr.rel (0) target = $region5
    $region4: #{tpu_custom_call.1} parent=1 // pred_region
      %s13 = ssub.s32 256, 256
      %14 = vsyncadd [#allocation3], %s13
      %s15 = sshll.u32 [#allocation2], 4
      %s16 = int_to_ptr.vmem [resolvable:$true] %s15
      %21 = dma.hbm_to_vmem [thread:$0]  %s0, 256, %s16, [#allocation3], 128, 128, 8
    $region5: #{tpu_custom_call.1} parent=1 // pred_fallthru
      _
    // Predicated region
    $region6: #{tpu_custom_call.1} parent=1 // pred_check
      _
    $region7: #{tpu_custom_call.1} parent=1 // pred_check_branch
      %23 = sbr.rel (0) target = $region9
    $region8: #{tpu_custom_call.1} parent=1 // pred_region
      %s25 = ssub.s32 2048, 2048
      %26 = vsyncadd [#allocation6], %s25
      %s27 = sshll.u32 [#allocation5], 4
      %s28 = int_to_ptr.vmem [resolvable:$true] %s27
      %33 = dma.hbm_to_vmem [thread:$0]  %s1, 2048, %s28, [#allocation6], 256, 256, 16
    $region9: #{tpu_custom_call.1} parent=1 // pred_fallthru
      _
    // Predicated region
    $region10: #{tpu_custom_call.1} parent=1 // pred_check
      _
    $region11: #{tpu_custom_call.1} parent=1 // pred_check_branch
      %35 = sbr.rel (0) target = $region13
    $region12: #{tpu_custom_call.1} parent=1 // pred_region
      %36 = dma.done [#allocation3], 256
    $region13: #{tpu_custom_call.1} parent=1 // pred_fallthru
      _
    // Predicated region
    $region14: #{tpu_custom_call.1} parent=1 // pred_check
      _
    $region15: #{tpu_custom_call.1} parent=1 // pred_check_branch
      %38 = sbr.rel (0) target = $region17
    $region16: #{tpu_custom_call.1} parent=1 // pred_region
      %39 = dma.done [#allocation6], 2048
    $region17: #{tpu_custom_call.1} parent=1 // pred_fallthru
      _
    %v40 = vld [vmem:[#allocation2] sm:$0xff]
    %v41 = vld [vmem:[#allocation2 + $0x8] sm:$0xff]
    %v42 = vld [vmem:[#allocation5] sm:$0xff]
    %v43 = vld [vmem:[#allocation5 + $0x8] sm:$0xff]
    %v44 = vld [vmem:[#allocation5 + $0x10] sm:$0xff]
    %v45 = vld [vmem:[#allocation5 + $0x18] sm:$0xff]
    %v46 = vld [vmem:[#allocation5 + $0x20] sm:$0xff]
    %v47 = vld [vmem:[#allocation5 + $0x28] sm:$0xff]
    %v48 = vld [vmem:[#allocation5 + $0x30] sm:$0xff]
    %v49 = vld [vmem:[#allocation5 + $0x38] sm:$0xff]
    %v50 = vld [vmem:[#allocation5 + $0x40] sm:$0xff]
    %v51 = vld [vmem:[#allocation5 + $0x48] sm:$0xff]
    %v52 = vld [vmem:[#allocation5 + $0x50] sm:$0xff]
    %v53 = vld [vmem:[#allocation5 + $0x58] sm:$0xff]
    %v54 = vld [vmem:[#allocation5 + $0x60] sm:$0xff]
    %v55 = vld [vmem:[#allocation5 + $0x68] sm:$0xff]
    %v56 = vld [vmem:[#allocation5 + $0x70] sm:$0xff]
    %v57 = vld [vmem:[#allocation5 + $0x78] sm:$0xff]
    %vm58 = vcmask 523264
    %v60 = vsel %vm58, %v40, 0
    %v63 = vsel %vm58, %v41, 0
    %65 = vmatprep.subr.mxu0 %v43
    %66 = vmatpush1.msra.mxu0 %v42
    %67 = vmatprep.subr.mxu0 %v45
    %68 = vmatpush1.msra.mxu0 %v44
    %69 = vmatprep.subr.mxu0 %v47
    %70 = vmatpush1.msra.mxu0 %v46
    %71 = vmatprep.subr.mxu0 %v49
    %72 = vmatpush1.msra.mxu0 %v48
    %73 = vmatprep.subr.mxu0 %v51
    %74 = vmatpush1.msra.mxu0 %v50
    %75 = vmatprep.subr.mxu0 %v53
    %76 = vmatpush1.msra.mxu0 %v52
    %77 = vmatprep.subr.mxu0 %v55
    %78 = vmatpush1.msra.mxu0 %v54
    %79 = vmatprep.subr.mxu0 %v57
    %80 = vmatpush1.msra.mxu0 %v56
    %81 = vmatprep.subr.mxu0 0.0
    %82 = vmatpush1.msra.mxu0 0.0
    %83 = vmatprep.subr.mxu0 0.0
    %84 = vmatpush1.msra.mxu0 0.0
    %85 = vmatprep.subr.mxu0 0.0
    %86 = vmatpush1.msra.mxu0 0.0
    %87 = vmatprep.subr.mxu0 0.0
    %88 = vmatpush1.msra.mxu0 0.0
    %89 = vmatprep.subr.mxu0 0.0
    %90 = vmatpush1.msra.mxu0 0.0
    %91 = vmatprep.subr.mxu0 0.0
    %92 = vmatpush1.msra.mxu0 0.0
    %93 = vmatprep.subr.mxu0 0.0
    %94 = vmatpush1.msra.mxu0 0.0
    %95 = vmatprep.subr.mxu0 0.0
    %96 = vmatpush1.msra.mxu0 0.0
    %97 = vmatprep.subr.mxu0 0.0
    %98 = vmatpush1.msra.mxu0 0.0
    %99 = vmatprep.subr.mxu0 0.0
    %100 = vmatpush1.msra.mxu0 0.0
    %101 = vmatprep.subr.mxu0 0.0
    %102 = vmatpush1.msra.mxu0 0.0
    %103 = vmatprep.subr.mxu0 0.0
    %104 = vmatpush1.msra.mxu0 0.0
    %105 = vmatprep.subr.mxu0 0.0
    %106 = vmatpush1.msra.mxu0 0.0
    %107 = vmatprep.subr.mxu0 0.0
    %108 = vmatpush1.msra.mxu0 0.0
    %109 = vmatprep.subr.mxu0 0.0
    %110 = vmatpush1.msra.mxu0 0.0
    %111 = vmatprep.subr.mxu0 0.0
    %112 = vmatpush1.msra.mxu0 0.0
    %113 = vmatprep.subr.mxu0 0.0
    %114 = vmatpush1.msra.mxu0 0.0
    %115 = vmatprep.subr.mxu0 0.0
    %116 = vmatpush1.msra.mxu0 0.0
    %117 = vmatprep.subr.mxu0 0.0
    %118 = vmatpush1.msra.mxu0 0.0
    %119 = vmatprep.subr.mxu0 0.0
    %120 = vmatpush1.msra.mxu0 0.0
    %121 = vmatprep.subr.mxu0 0.0
    %122 = vmatpush1.msra.mxu0 0.0
    %123 = vmatprep.subr.mxu0 0.0
    %124 = vmatpush1.msra.mxu0 0.0
    %125 = vmatprep.subr.mxu0 0.0
    %126 = vmatpush1.msra.mxu0 0.0
    %127 = vmatprep.subr.mxu0 0.0
    %128 = vmatpush1.msra.mxu0 0.0
    %129 = vmatprep.mubr.f32.mxu0 0.0
    %130 = vmatmul.mubr.f32.gmra.mrb[0].mxu0 %v60
    %v131 = vpop.f32.mrb[0].mxu0
    %v132 = vadd.f32 0.0, %v131
    %v133 = vpop.f32.mrb[0].mxu0
    %v134 = vadd.f32 0.0, %v133
    %135 = vmatprep.mubr.f32.mxu0 0.0
    %136 = vmatmul.mubr.f32.gmra.mrb[0].mxu0 %v63
    %v137 = vpop.f32.mrb[0].mxu0
    %v138 = vadd.f32 0.0, %v137
    %v139 = vpop.f32.mrb[0].mxu0
    %v140 = vadd.f32 0.0, %v139
    %141 = vdwg.mxu0
    %v142 = vmax.f32 %v132, 0.0
    %v143 = vmax.f32 %v134, 0.0
    %v144 = vmax.f32 %v138, 0.0
    %v145 = vmax.f32 %v140, 0.0
    %146 = vst [vmem:[#allocation7] sm:$0xff] %v142
    %147 = vst [vmem:[#allocation7 + $0x8] sm:$0xff] %v143
    %148 = vst [vmem:[#allocation7 + $0x10] sm:$0xff] %v144
    %149 = vst [vmem:[#allocation7 + $0x18] sm:$0xff] %v145
    // Predicated region
    $region18: #{tpu_custom_call.1} parent=1 // pred_check
      _
    $region19: #{tpu_custom_call.1} parent=1 // pred_check_branch
      %151 = sbr.rel (0) target = $region21
    $region20: #{tpu_custom_call.1} parent=1 // pred_region
      %s153 = ssub.s32 512, 512
      %154 = vsyncadd [#allocation4], %s153
      %s155 = sshll.u32 [#allocation7], 4
      %s156 = int_to_ptr.vmem [resolvable:$true] %s155
      %161 = dma.vmem_to_hbm [thread:$0]  %s156, 512, %s2, [#allocation4], 256, 256, 16
    $region21: #{tpu_custom_call.1} parent=1 // pred_fallthru
      _
    // Predicated region
    $region22: #{tpu_custom_call.1} parent=1 // pred_check
      _
    $region23: #{tpu_custom_call.1} parent=1 // pred_check_branch
      %163 = sbr.rel (0) target = $region25
    $region24: #{tpu_custom_call.1} parent=1 // pred_region
      %164 = dma.done [#allocation4], 512
    $region25: #{tpu_custom_call.1} parent=1 // pred_fallthru
      _
    %165 = vsyncpa [#allocation3], 1
    %166 = vsyncpa [#allocation6], 1
    %167 = vsyncpa [#allocation4], 1

</llo_original>
